<compile_context>
chip_gen: v6e
topology: v6e:2x2x1
jax: 0.10.0
libtpu: 0.0.40
codegen_flags: <defaults>
</compile_context>

<pallas_src>
import jax
import jax.numpy as jnp
from jax.experimental import pallas as pl
from jax.experimental.pallas import tpu as pltpu
import numpy as np


def ripplenet_kernel(q_ref, h_ref, u_ref):
    """q_ref, h_ref: [H, tb, M, D] bf16.  u_ref: [tb, D] f32 (per-user vector)."""
    H = q_ref.shape[0]
    u = jnp.zeros(u_ref.shape, jnp.float32)
    for hop in range(H):  # H is tiny and static -> unrolled at trace time
        h = h_ref[hop]                                        # [tb, M, D] bf16
        q = q_ref[hop]                                        # [tb, M, D] bf16
        # vRh[b, m] = item[b]^T R_{idx[b,m]} h[b, m]  (bf16 multiply, f32 accumulate)
        vRh = jnp.sum(h * q, axis=-1, dtype=jnp.float32)      # [tb, M]
        # softmax over the ripple-set axis (dim=1 in the PyTorch module)
        m_max = jnp.max(vRh, axis=1, keepdims=True)
        e = jnp.exp(vRh - m_max)
        p = e * pl.reciprocal(jnp.sum(e, axis=1, keepdims=True), approx=True)
        # u += sum_m p[b, m] * t[b, m, :]   (reference uses the same rows for h and t)
        pt = p[:, :, None].astype(jnp.bfloat16) * h           # bf16 multiply
        u = u + jnp.sum(pt, axis=1, dtype=jnp.float32)        # f32 accumulate
    u_ref[...] = u


def _round_up(x, m):
    return -(-x // m) * m


def _pick_block_b(B):
    # Batch tile: multiple of 8 (sublane), capped at 256 rows (blocks stay at a
    # few hundred KB even for M<=64, D<=64, double-buffered).  For mid-sized
    # batches split into >=2 parallel blocks so v7x's two TensorCores both get
    # work; tiny batches just pad to a single 8-row block.
    if B <= 16:
        return _round_up(B, 8)
    return min(256, _round_up(-(-B // 2), 8))


def ripplenet_pallas(entity_emb, relation_emb, edge_index, ripple_sets, emb_dim):
    """Embedding gathers + hop stacking in XLA, per-hop attention in Pallas."""
    D = emb_dim
    n_rel = relation_emb.shape[0]

    item_emb = entity_emb[edge_index[:, 1]]                                   # [B, D] f32
    B = item_emb.shape[0]

    # Hop-stacked gathers (XLA).  Entity rows travel as bf16; only relation
    # *indices* are used -- the [H, B, M, D, D] expansion never exists.
    h_all = jnp.stack([entity_emb[rs[:, :, 0]] for rs in ripple_sets], axis=0)   # [H,B,M,D]
    idx_all = jnp.stack([rs[:, :, 1] for rs in ripple_sets], axis=0).astype(jnp.int32)  # [H,B,M]
    H, _, M, _ = h_all.shape

    # Hop-invariant factor: itemR[b, r, j] = sum_i item[b, i] * R_r[i, j]
    rel3 = relation_emb.reshape(n_rel, D, D)
    itemR = jnp.einsum("bi,rij->brj", item_emb, rel3)                         # [B, n_rel, D]

    # Gather the relation row each ripple-set member actually uses.
    b_idx = jnp.arange(B)[None, :, None]                                      # [1, B, 1]
    q_all = itemR[b_idx, idx_all]                                             # [H, B, M, D]

    h_all = h_all.astype(jnp.bfloat16)
    q_all = q_all.astype(jnp.bfloat16)

    # Ragged batch: cdiv grid + zero padding (padded rows produce u = 0 and are
    # sliced away; the softmax over all-zero rows is well defined).
    tb = _pick_block_b(B)
    nb = pl.cdiv(B, tb)
    B_pad = nb * tb
    if B_pad != B:
        pad = B_pad - B
        h_all = jnp.pad(h_all, ((0, 0), (0, pad), (0, 0), (0, 0)))
        q_all = jnp.pad(q_all, ((0, 0), (0, pad), (0, 0), (0, 0)))

    grid_spec = pltpu.PrefetchScalarGridSpec(
        num_scalar_prefetch=0,
        grid=(nb,),
        in_specs=[
            pl.BlockSpec((H, tb, M, D), lambda i: (0, i, 0, 0)),   # q_all
            pl.BlockSpec((H, tb, M, D), lambda i: (0, i, 0, 0)),   # h_all
        ],
        out_specs=pl.BlockSpec((tb, D), lambda i: (i, 0)),
    )

    u = pl.pallas_call(
        ripplenet_kernel,
        out_shape=jax.ShapeDtypeStruct((B_pad, D), jnp.float32),
        grid_spec=grid_spec,
        compiler_params=pltpu.CompilerParams(
            dimension_semantics=("parallel",),
        ),
    )(q_all, h_all)

    u = u[:B]
    # Final score: out[b] = sum_d u[b, d] * item[b, d]   (tiny, done in XLA)
    return jnp.sum(u * item_emb, axis=1, keepdims=True)                       # [B, 1]


def ripplenet_reference(entity_emb, relation_emb, edge_index, ripple_sets, emb_dim):
    """Pure-JAX (f32) transliteration of the PyTorch forward, for verification."""
    item_emb = entity_emb[edge_index[:, 1]][:, :, None]                       # [B, D, 1]
    u = jnp.zeros_like(item_emb)
    for rs in ripple_sets:
        B, M, _ = rs.shape
        R = relation_emb[rs[:, :, 1]].reshape(B, M, emb_dim, emb_dim)
        h = entity_emb[rs[:, :, 0]][..., None]                                # [B, M, D, 1]
        Rh = jnp.matmul(R, h)[..., 0]                                         # [B, M, D]
        vRh = jnp.matmul(Rh, item_emb)[..., 0]                                # [B, M]
        p = jax.nn.softmax(vRh, axis=1)[..., None]                            # [B, M, 1]
        t = entity_emb[rs[:, :, 0]]                                           # [B, M, D]
        u = u + jnp.sum(p * t, axis=1)[..., None]
    return jnp.sum(u * item_emb, axis=1)                                      # [B, 1]


if __name__ == "__main__":
    emb_dim = 16
    n_relations = 6
    n_entities = 40
    batch = 4
    ripple_size = 8
    n_hops = 2

    key = jax.random.PRNGKey(0)
    k_ent, k_rel, k_edge, k_rs_e, k_rs_r = jax.random.split(key, 5)

    # nn.Embedding with padding_idx=0 -> row 0 is zero.
    entity_emb = jax.random.normal(k_ent, (n_entities, emb_dim), jnp.float32) * 0.1
    entity_emb = entity_emb.at[0].set(0.0)
    relation_emb = jax.random.normal(k_rel, (n_relations, emb_dim * emb_dim), jnp.float32) * 0.1
    relation_emb = relation_emb.at[0].set(0.0)

    # Inputs: edge_index[:,1] are item ids; ripple_sets[h][:,:,0]=entity, [:,:,1]=relation.
    edge_index = jax.random.randint(k_edge, (batch, 2), 0, n_entities, jnp.int32)
    rs_entities = jax.random.randint(k_rs_e, (n_hops, batch, ripple_size), 0, n_entities, jnp.int32)
    rs_relations = jax.random.randint(k_rs_r, (n_hops, batch, ripple_size), 0, n_relations, jnp.int32)
    ripple_sets = [jnp.stack([rs_entities[h], rs_relations[h]], axis=-1) for h in range(n_hops)]

    out = ripplenet_pallas(entity_emb, relation_emb, edge_index, ripple_sets, emb_dim)
    out = jax.block_until_ready(out)

    ref = ripplenet_reference(entity_emb, relation_emb, edge_index, ripple_sets, emb_dim)
    # bf16 streaming of the ripple-set rows / item-relation rows -> bf16-level tolerance.
    np.testing.assert_allclose(np.asarray(out), np.asarray(ref), rtol=2e-2, atol=2e-3)

    print("KERNEL_OK")
</pallas_src>

<mosaic_0001>
module attributes {stable_mosaic.version = 11 : i64} {
  func.func @ripplenet_kernel(%arg0: i32, %arg1: memref<2x8x8x16xbf16, #tpu.memory_space<vmem>>, %arg2: memref<2x8x8x16xbf16, #tpu.memory_space<vmem>>, %arg3: memref<8x16xf32, #tpu.memory_space<vmem>>) attributes {dimension_semantics = [#tpu.dimension_semantics<parallel>], iteration_bounds = array<i64: 1>, scalar_prefetch = 0 : i64, scratch_operands = 0 : i64, tpu.core_type = #tpu.core_type<tc>, window_params = [{transform_indices = @transform_0, window_bounds = array<i64: 2, 8, 8, 16>}, {transform_indices = @transform_1, window_bounds = array<i64: 2, 8, 8, 16>}, {transform_indices = @transform_2, window_bounds = array<i64: 8, 16>}]} {
    %cst = arith.constant 0.000000e+00 : f32
    %0 = vector.broadcast %cst : f32 to vector<8x16xf32>
    %c0 = arith.constant 0 : index
    %c0_0 = arith.constant 0 : index
    %c0_1 = arith.constant 0 : index
    %c0_2 = arith.constant 0 : index
    %1 = vector.load %arg2[%c0, %c0_0, %c0_1, %c0_2] : memref<2x8x8x16xbf16, #tpu.memory_space<vmem>>, vector<1x8x8x16xbf16>
    %2 = vector.shape_cast %1 : vector<1x8x8x16xbf16> to vector<8x8x16xbf16>
    %c0_3 = arith.constant 0 : index
    %c0_4 = arith.constant 0 : index
    %c0_5 = arith.constant 0 : index
    %c0_6 = arith.constant 0 : index
    %3 = vector.load %arg1[%c0_3, %c0_4, %c0_5, %c0_6] : memref<2x8x8x16xbf16, #tpu.memory_space<vmem>>, vector<1x8x8x16xbf16>
    %4 = vector.shape_cast %3 : vector<1x8x8x16xbf16> to vector<8x8x16xbf16>
    %5 = arith.mulf %2, %4 : vector<8x8x16xbf16>
    %6 = arith.extf %5 : vector<8x8x16xbf16> to vector<8x8x16xf32>
    %cst_7 = arith.constant dense<0.000000e+00> : vector<8x8xf32>
    %7 = vector.multi_reduction <add>, %6, %cst_7 [2] : vector<8x8x16xf32> to vector<8x8xf32>
    %cst_8 = arith.constant dense<0xFF800000> : vector<8xf32>
    %8 = vector.multi_reduction <maximumf>, %7, %cst_8 [1] : vector<8x8xf32> to vector<8xf32>
    %9 = vector.shape_cast %8 : vector<8xf32> to vector<8x1xf32>
    %10 = vector.broadcast %9 : vector<8x1xf32> to vector<8x8xf32>
    %11 = arith.subf %7, %10 : vector<8x8xf32>
    %12 = math.exp %11 : vector<8x8xf32>
    %cst_9 = arith.constant dense<0.000000e+00> : vector<8xf32>
    %13 = vector.multi_reduction <add>, %12, %cst_9 [1] : vector<8x8xf32> to vector<8xf32>
    %14 = vector.shape_cast %13 : vector<8xf32> to vector<8x1xf32>
    %15 = tpu.reciprocal %14 {approx = true} : vector<8x1xf32> -> vector<8x1xf32>
    %16 = vector.broadcast %15 : vector<8x1xf32> to vector<8x8xf32>
    %17 = arith.mulf %12, %16 : vector<8x8xf32>
    %18 = vector.shape_cast %17 : vector<8x8xf32> to vector<8x8x1xf32>
    %19 = arith.truncf %18 : vector<8x8x1xf32> to vector<8x8x1xbf16>
    %20 = vector.broadcast %19 : vector<8x8x1xbf16> to vector<8x8x16xbf16>
    %21 = arith.mulf %20, %2 : vector<8x8x16xbf16>
    %22 = arith.extf %21 : vector<8x8x16xbf16> to vector<8x8x16xf32>
    %cst_10 = arith.constant dense<0.000000e+00> : vector<8x16xf32>
    %23 = vector.multi_reduction <add>, %22, %cst_10 [1] : vector<8x8x16xf32> to vector<8x16xf32>
    %24 = arith.addf %0, %23 : vector<8x16xf32>
    %c1 = arith.constant 1 : index
    %c0_11 = arith.constant 0 : index
    %c0_12 = arith.constant 0 : index
    %c0_13 = arith.constant 0 : index
    %25 = vector.load %arg2[%c1, %c0_11, %c0_12, %c0_13] : memref<2x8x8x16xbf16, #tpu.memory_space<vmem>>, vector<1x8x8x16xbf16>
    %26 = vector.shape_cast %25 : vector<1x8x8x16xbf16> to vector<8x8x16xbf16>
    %c1_14 = arith.constant 1 : index
    %c0_15 = arith.constant 0 : index
    %c0_16 = arith.constant 0 : index
    %c0_17 = arith.constant 0 : index
    %27 = vector.load %arg1[%c1_14, %c0_15, %c0_16, %c0_17] : memref<2x8x8x16xbf16, #tpu.memory_space<vmem>>, vector<1x8x8x16xbf16>
    %28 = vector.shape_cast %27 : vector<1x8x8x16xbf16> to vector<8x8x16xbf16>
    %29 = arith.mulf %26, %28 : vector<8x8x16xbf16>
    %30 = arith.extf %29 : vector<8x8x16xbf16> to vector<8x8x16xf32>
    %cst_18 = arith.constant dense<0.000000e+00> : vector<8x8xf32>
    %31 = vector.multi_reduction <add>, %30, %cst_18 [2] : vector<8x8x16xf32> to vector<8x8xf32>
    %cst_19 = arith.constant dense<0xFF800000> : vector<8xf32>
    %32 = vector.multi_reduction <maximumf>, %31, %cst_19 [1] : vector<8x8xf32> to vector<8xf32>
    %33 = vector.shape_cast %32 : vector<8xf32> to vector<8x1xf32>
    %34 = vector.broadcast %33 : vector<8x1xf32> to vector<8x8xf32>
    %35 = arith.subf %31, %34 : vector<8x8xf32>
    %36 = math.exp %35 : vector<8x8xf32>
    %cst_20 = arith.constant dense<0.000000e+00> : vector<8xf32>
    %37 = vector.multi_reduction <add>, %36, %cst_20 [1] : vector<8x8xf32> to vector<8xf32>
    %38 = vector.shape_cast %37 : vector<8xf32> to vector<8x1xf32>
    %39 = tpu.reciprocal %38 {approx = true} : vector<8x1xf32> -> vector<8x1xf32>
    %40 = vector.broadcast %39 : vector<8x1xf32> to vector<8x8xf32>
    %41 = arith.mulf %36, %40 : vector<8x8xf32>
    %42 = vector.shape_cast %41 : vector<8x8xf32> to vector<8x8x1xf32>
    %43 = arith.truncf %42 : vector<8x8x1xf32> to vector<8x8x1xbf16>
    %44 = vector.broadcast %43 : vector<8x8x1xbf16> to vector<8x8x16xbf16>
    %45 = arith.mulf %44, %26 : vector<8x8x16xbf16>
    %46 = arith.extf %45 : vector<8x8x16xbf16> to vector<8x8x16xf32>
    %cst_21 = arith.constant dense<0.000000e+00> : vector<8x16xf32>
    %47 = vector.multi_reduction <add>, %46, %cst_21 [1] : vector<8x8x16xf32> to vector<8x16xf32>
    %48 = arith.addf %24, %47 : vector<8x16xf32>
    %c0_22 = arith.constant 0 : index
    %c0_23 = arith.constant 0 : index
    %49 = vector.load %arg3[%c0_22, %c0_23] : memref<8x16xf32, #tpu.memory_space<vmem>>, vector<8x16xf32>
    tpu.vector_store %arg3[%c0_22, %c0_23], %48 {strides = array<i32>} : memref<8x16xf32, #tpu.memory_space<vmem>>, vector<8x16xf32>,
    return
  }
  func.func @transform_0(%arg0: i32) -> (i32, i32, i32, i32) {
    %c0_i32 = arith.constant 0 : i32
    %c0_i32_0 = arith.constant 0 : i32
    %c0_i32_1 = arith.constant 0 : i32
    %c0_i32_2 = arith.constant 0 : i32
    return %c0_i32, %arg0, %c0_i32_0, %c0_i32_1 : i32, i32, i32, i32
  }
  func.func @transform_1(%arg0: i32) -> (i32, i32, i32, i32) {
    %c0_i32 = arith.constant 0 : i32
    %c0_i32_0 = arith.constant 0 : i32
    %c0_i32_1 = arith.constant 0 : i32
    %c0_i32_2 = arith.constant 0 : i32
    return %c0_i32, %arg0, %c0_i32_0, %c0_i32_1 : i32, i32, i32, i32
  }
  func.func @transform_2(%arg0: i32) -> (i32, i32) {
    %c0_i32 = arith.constant 0 : i32
    %c0_i32_0 = arith.constant 0 : i32
    return %arg0, %c0_i32 : i32, i32
  }
}

</mosaic_0001>

<llo_original>
// kernel: tpu_custom_call.1
$region0: #{tpu_custom_call.1}
  #allocation0 [shape = 'u32[]', space=smem, size = 0x4, offset = 0x4, fixed_abs, tag = 'smem constant byte address 0x4 - core index']
  #allocation1 [shape = 'u32[144,128]{1,0:T(1,128)}', space=vmem, size = 0x12000, scoped, tag = 'internal scratch']
  %s0 = inlined_call_operand.hbm [shape: bf16[2,8,8,16], index: 0, kind: input, shape index: {}]
  %s1 = inlined_call_operand.hbm [shape: bf16[2,8,8,16], index: 1, kind: input, shape index: {}]
  %s2 = inlined_call_operand.hbm [shape: f32[8,16], index: 2, kind: output, shape index: {}]
  %s3 = sld [smem:[#allocation0]]
  $region26: #{tpu_custom_call.1} parent=0
    _
  %s5 = ssub.s32 1, %s3
  %s6 = scalar_select 0, %s5, %s3
  $region1: #{tpu_custom_call.1} parent=0
    #allocation2 [shape = 'u8[32768]{0}', space=vmem, size = 0x8000, scoped, tag = 'input window, operand 0, single buffered']
    #allocation3 [shape = 's32[1]{0}', space=sflag, size = 0x4, scoped, tag = 'scoped memory for tpu_custom_call.1']
    #allocation4 [shape = 's32[1]{0}', space=sflag, size = 0x4, scoped, tag = 'scoped memory for tpu_custom_call.1']
    #allocation5 [shape = 'u8[32768]{0}', space=vmem, size = 0x8000, scoped, tag = 'input window, operand 1, single buffered']
    #allocation6 [shape = 's32[1]{0}', space=sflag, size = 0x4, scoped, tag = 'scoped memory for tpu_custom_call.1']
    #allocation7 [shape = 'u8[4096]{0}', space=vmem, size = 0x1000, scoped, tag = 'output window, operand 0, single buffered']
    %7 = vsyncpa [#allocation3], 0
    %8 = vsyncpa [#allocation6], 0
    %9 = vsyncpa [#allocation4], 0
    // Predicated region
    $region2: #{tpu_custom_call.1} parent=1 // pred_check
      _
    $region3: #{tpu_custom_call.1} parent=1 // pred_check_branch
      %11 = sbr.rel (0) target = $region5
    $region4: #{tpu_custom_call.1} parent=1 // pred_region
      %s13 = ssub.s32 1024, 1024
      %14 = vsyncadd [#allocation3], %s13
      %s15 = sshll.u32 [#allocation2], 4
      %s16 = int_to_ptr.vmem [resolvable:$true] %s15
      %21 = dma.hbm_to_vmem [thread:$0]  %s0, 1024, %s16, [#allocation3], 64, 64, 4
    $region5: #{tpu_custom_call.1} parent=1 // pred_fallthru
      _
    // Predicated region
    $region6: #{tpu_custom_call.1} parent=1 // pred_check
      _
    $region7: #{tpu_custom_call.1} parent=1 // pred_check_branch
      %23 = sbr.rel (0) target = $region9
    $region8: #{tpu_custom_call.1} parent=1 // pred_region
      %s25 = ssub.s32 1024, 1024
      %26 = vsyncadd [#allocation6], %s25
      %s27 = sshll.u32 [#allocation5], 4
      %s28 = int_to_ptr.vmem [resolvable:$true] %s27
      %33 = dma.hbm_to_vmem [thread:$0]  %s1, 1024, %s28, [#allocation6], 64, 64, 4
    $region9: #{tpu_custom_call.1} parent=1 // pred_fallthru
      _
    // Predicated region
    $region10: #{tpu_custom_call.1} parent=1 // pred_check
      _
    $region11: #{tpu_custom_call.1} parent=1 // pred_check_branch
      %35 = sbr.rel (0) target = $region13
    $region12: #{tpu_custom_call.1} parent=1 // pred_region
      %36 = dma.done [#allocation3], 1024
    $region13: #{tpu_custom_call.1} parent=1 // pred_fallthru
      _
    // Predicated region
    $region14: #{tpu_custom_call.1} parent=1 // pred_check
      _
    $region15: #{tpu_custom_call.1} parent=1 // pred_check_branch
      %38 = sbr.rel (0) target = $region17
    $region16: #{tpu_custom_call.1} parent=1 // pred_region
      %39 = dma.done [#allocation6], 1024
    $region17: #{tpu_custom_call.1} parent=1 // pred_fallthru
      _
    %v40 = vld [vmem:[#allocation5] sm:$0xf]
    %v41 = vld [vmem:[#allocation5 + $0x4] sm:$0xf]
    %v42 = vld [vmem:[#allocation5 + $0x8] sm:$0xf]
    %v43 = vld [vmem:[#allocation5 + $0xc] sm:$0xf]
    %v44 = vld [vmem:[#allocation5 + $0x10] sm:$0xf]
    %v45 = vld [vmem:[#allocation5 + $0x14] sm:$0xf]
    %v46 = vld [vmem:[#allocation5 + $0x18] sm:$0xf]
    %v47 = vld [vmem:[#allocation5 + $0x1c] sm:$0xf]
    %v48 = vld [vmem:[#allocation2] sm:$0xf]
    %v49 = vld [vmem:[#allocation2 + $0x4] sm:$0xf]
    %v50 = vld [vmem:[#allocation2 + $0x8] sm:$0xf]
    %v51 = vld [vmem:[#allocation2 + $0xc] sm:$0xf]
    %v52 = vld [vmem:[#allocation2 + $0x10] sm:$0xf]
    %v53 = vld [vmem:[#allocation2 + $0x14] sm:$0xf]
    %v54 = vld [vmem:[#allocation2 + $0x18] sm:$0xf]
    %v55 = vld [vmem:[#allocation2 + $0x1c] sm:$0xf]
    %v56 = vmul.bf16 %v40, %v48
    %v57 = vmul.bf16 %v41, %v49
    %v58 = vmul.bf16 %v42, %v50
    %v59 = vmul.bf16 %v43, %v51
    %v60 = vmul.bf16 %v44, %v52
    %v61 = vmul.bf16 %v45, %v53
    %v62 = vmul.bf16 %v46, %v54
    %v63 = vmul.bf16 %v47, %v55
    %v64 = vunpack.c.l.bf16 %v56
    %v65 = vunpack.c.l.bf16 %v57
    %v66 = vunpack.c.l.bf16 %v58
    %v67 = vunpack.c.l.bf16 %v59
    %v68 = vunpack.c.l.bf16 %v60
    %v69 = vunpack.c.l.bf16 %v61
    %v70 = vunpack.c.l.bf16 %v62
    %v71 = vunpack.c.l.bf16 %v63
    %vm72 = vcmask 130048
    %v73 = vsel %vm72, %v64, 0.0
    %74 = vadd.xlane.f32.xlu0 %v73
    %v75 = vpop.xlane.xlu0 %74
    %v76 = vsel %vm72, %v65, 0.0
    %77 = vadd.xlane.f32.xlu0 %v76
    %v78 = vpop.xlane.xlu0 %77
    %v79 = vsel %vm72, %v66, 0.0
    %80 = vadd.xlane.f32.xlu0 %v79
    %v81 = vpop.xlane.xlu0 %80
    %v82 = vsel %vm72, %v67, 0.0
    %83 = vadd.xlane.f32.xlu0 %v82
    %v84 = vpop.xlane.xlu0 %83
    %v85 = vsel %vm72, %v68, 0.0
    %86 = vadd.xlane.f32.xlu0 %v85
    %v87 = vpop.xlane.xlu0 %86
    %v88 = vsel %vm72, %v69, 0.0
    %89 = vadd.xlane.f32.xlu0 %v88
    %v90 = vpop.xlane.xlu0 %89
    %v91 = vsel %vm72, %v70, 0.0
    %92 = vadd.xlane.f32.xlu0 %v91
    %v93 = vpop.xlane.xlu0 %92
    %v94 = vsel %vm72, %v71, 0.0
    %95 = vadd.xlane.f32.xlu0 %v94
    %v96 = vpop.xlane.xlu0 %95
    %v105 = vlaneseq
    %v106 = vand.u32 %v105, 127
    %v107 = vlaneseq
    %v108 = vshrl.u32 %v107, 7
    %v109 = vsub.s32 %v106, %v108
    %v110 = vrot.slane %v75, %v109
    %v111 = vlaneseq
    %v112 = vshrl.u32 %v111, 7
    %v113 = vsub.s32 %v106, %v112
    %v114 = vrot.slane %v78, %v113
    %v115 = vlaneseq
    %v116 = vshrl.u32 %v115, 7
    %v117 = vsub.s32 %v106, %v116
    %v118 = vrot.slane %v81, %v117
    %v119 = vlaneseq
    %v120 = vshrl.u32 %v119, 7
    %v121 = vsub.s32 %v106, %v120
    %v122 = vrot.slane %v84, %v121
    %v123 = vlaneseq
    %v124 = vshrl.u32 %v123, 7
    %v125 = vsub.s32 %v106, %v124
    %v126 = vrot.slane %v87, %v125
    %v127 = vlaneseq
    %v128 = vshrl.u32 %v127, 7
    %v129 = vsub.s32 %v106, %v128
    %v130 = vrot.slane %v90, %v129
    %v131 = vlaneseq
    %v132 = vshrl.u32 %v131, 7
    %v133 = vsub.s32 %v106, %v132
    %v134 = vrot.slane %v93, %v133
    %v135 = vlaneseq
    %v136 = vshrl.u32 %v135, 7
    %v137 = vsub.s32 %v106, %v136
    %v138 = vrot.slane %v96, %v137
    %vm139 = vcmask 1041409
    %v140 = vsel %vm139, %v114, %v110
    %vm141 = vcmask 1042434
    %v142 = vsel %vm141, %v118, %v140
    %vm143 = vcmask 1043459
    %v144 = vsel %vm143, %v122, %v142
    %vm145 = vcmask 1044484
    %v146 = vsel %vm145, %v126, %v144
    %vm147 = vcmask 1045509
    %v148 = vsel %vm147, %v130, %v146
    %vm149 = vcmask 1046534
    %v150 = vsel %vm149, %v134, %v148
    %vm151 = vcmask 1047559
    %v152 = vsel %vm151, %v138, %v150
    %vm154 = vcmask 64512
    %v155 = vsel %vm154, %v152, -inf
    %156 = vmax.xlane.f32.xlu0 %v155
    %v157 = vpop.xlane.xlu0 %156
    %v159 = vlaneseq
    %v160 = vshrl.u32 %v159, 7
    %v161 = vsub.s32 0, %v160
    %v162 = vrot.slane %v157, %v161
    %v163 = vlaneseq
    %v164 = vshrl.u32 %v163, 7
    %v165 = vsub.s32 1, %v164
    %v166 = vrot.slane %v157, %v165
    %v167 = vlaneseq
    %v168 = vshrl.u32 %v167, 7
    %v169 = vsub.s32 2, %v168
    %v170 = vrot.slane %v157, %v169
    %v171 = vlaneseq
    %v172 = vshrl.u32 %v171, 7
    %v173 = vsub.s32 3, %v172
    %v174 = vrot.slane %v157, %v173
    %v175 = vlaneseq
    %v176 = vshrl.u32 %v175, 7
    %v177 = vsub.s32 4, %v176
    %v178 = vrot.slane %v157, %v177
    %v179 = vlaneseq
    %v180 = vshrl.u32 %v179, 7
    %v181 = vsub.s32 5, %v180
    %v182 = vrot.slane %v157, %v181
    %v183 = vlaneseq
    %v184 = vshrl.u32 %v183, 7
    %v185 = vsub.s32 6, %v184
    %v186 = vrot.slane %v157, %v185
    %v187 = vlaneseq
    %v188 = vshrl.u32 %v187, 7
    %v189 = vsub.s32 7, %v188
    %v190 = vrot.slane %v157, %v189
    %v199 = vsub.f32 %v75, %v162
    %v200 = vsub.f32 %v78, %v166
    %v201 = vsub.f32 %v81, %v170
    %v202 = vsub.f32 %v84, %v174
    %v203 = vsub.f32 %v87, %v178
    %v204 = vsub.f32 %v90, %v182
    %v205 = vsub.f32 %v93, %v186
    %v206 = vsub.f32 %v96, %v190
    %v207 = vmul.f32 %v199, 1.442695
    %v208 = vpow.pop %v207
    %v209 = vmul.f32 %v200, 1.442695
    %v210 = vpow.pop %v209
    %v211 = vmul.f32 %v201, 1.442695
    %v212 = vpow.pop %v211
    %v213 = vmul.f32 %v202, 1.442695
    %v214 = vpow.pop %v213
    %v215 = vmul.f32 %v203, 1.442695
    %v216 = vpow.pop %v215
    %v217 = vmul.f32 %v204, 1.442695
    %v218 = vpow.pop %v217
    %v219 = vmul.f32 %v205, 1.442695
    %v220 = vpow.pop %v219
    %v221 = vmul.f32 %v206, 1.442695
    %v222 = vpow.pop %v221
    %231 = vset.pattern.permute.xlu0 0
    %232 = vperm.xlu0 %231, %v208
    %v233 = vpop.permute.xlu0 %232
    %234 = vset.pattern.permute.xlu0 0
    %235 = vperm.xlu0 %234, %v210
    %v236 = vpop.permute.xlu0 %235
    %237 = vset.pattern.permute.xlu0 0
    %238 = vperm.xlu0 %237, %v212
    %v239 = vpop.permute.xlu0 %238
    %240 = vset.pattern.permute.xlu0 0
    %241 = vperm.xlu0 %240, %v214
    %v242 = vpop.permute.xlu0 %241
    %243 = vset.pattern.permute.xlu0 0
    %244 = vperm.xlu0 %243, %v216
    %v245 = vpop.permute.xlu0 %244
    %246 = vset.pattern.permute.xlu0 0
    %247 = vperm.xlu0 %246, %v218
    %v248 = vpop.permute.xlu0 %247
    %249 = vset.pattern.permute.xlu0 0
    %250 = vperm.xlu0 %249, %v220
    %v251 = vpop.permute.xlu0 %250
    %252 = vset.pattern.permute.xlu0 0
    %253 = vperm.xlu0 %252, %v222
    %v254 = vpop.permute.xlu0 %253
    %v255 = vlaneseq
    %v256 = vshrl.u32 %v255, 7
    %v257 = vsub.s32 %v106, %v256
    %v258 = vrot.slane %v233, %v257
    %v259 = vlaneseq
    %v260 = vshrl.u32 %v259, 7
    %v261 = vsub.s32 %v106, %v260
    %v262 = vrot.slane %v236, %v261
    %v263 = vlaneseq
    %v264 = vshrl.u32 %v263, 7
    %v265 = vsub.s32 %v106, %v264
    %v266 = vrot.slane %v239, %v265
    %v267 = vlaneseq
    %v268 = vshrl.u32 %v267, 7
    %v269 = vsub.s32 %v106, %v268
    %v270 = vrot.slane %v242, %v269
    %v271 = vlaneseq
    %v272 = vshrl.u32 %v271, 7
    %v273 = vsub.s32 %v106, %v272
    %v274 = vrot.slane %v245, %v273
    %v275 = vlaneseq
    %v276 = vshrl.u32 %v275, 7
    %v277 = vsub.s32 %v106, %v276
    %v278 = vrot.slane %v248, %v277
    %v279 = vlaneseq
    %v280 = vshrl.u32 %v279, 7
    %v281 = vsub.s32 %v106, %v280
    %v282 = vrot.slane %v251, %v281
    %v283 = vlaneseq
    %v284 = vshrl.u32 %v283, 7
    %v285 = vsub.s32 %v106, %v284
    %v286 = vrot.slane %v254, %v285
    %v287 = vsel %vm139, %v262, %v258
    %v288 = vsel %vm141, %v266, %v287
    %v289 = vsel %vm143, %v270, %v288
    %v290 = vsel %vm145, %v274, %v289
    %v291 = vsel %vm147, %v278, %v290
    %v292 = vsel %vm149, %v282, %v291
    %v293 = vsel %vm151, %v286, %v292
    %v295 = vsel %vm154, %v293, 0.0
    %296 = vadd.xlane.f32.xlu0 %v295
    %v297 = vpop.xlane.xlu0 %296
    %v298 = vrcp.pop %v297
    %v300 = vlaneseq
    %v301 = vshrl.u32 %v300, 7
    %v302 = vsub.s32 0, %v301
    %v303 = vrot.slane %v298, %v302
    %v304 = vlaneseq
    %v305 = vshrl.u32 %v304, 7
    %v306 = vsub.s32 1, %v305
    %v307 = vrot.slane %v298, %v306
    %v308 = vlaneseq
    %v309 = vshrl.u32 %v308, 7
    %v310 = vsub.s32 2, %v309
    %v311 = vrot.slane %v298, %v310
    %v312 = vlaneseq
    %v313 = vshrl.u32 %v312, 7
    %v314 = vsub.s32 3, %v313
    %v315 = vrot.slane %v298, %v314
    %v316 = vlaneseq
    %v317 = vshrl.u32 %v316, 7
    %v318 = vsub.s32 4, %v317
    %v319 = vrot.slane %v298, %v318
    %v320 = vlaneseq
    %v321 = vshrl.u32 %v320, 7
    %v322 = vsub.s32 5, %v321
    %v323 = vrot.slane %v298, %v322
    %v324 = vlaneseq
    %v325 = vshrl.u32 %v324, 7
    %v326 = vsub.s32 6, %v325
    %v327 = vrot.slane %v298, %v326
    %v328 = vlaneseq
    %v329 = vshrl.u32 %v328, 7
    %v330 = vsub.s32 7, %v329
    %v331 = vrot.slane %v298, %v330
    %v340 = vmul.f32 %v208, %v303
    %v341 = vmul.f32 %v210, %v307
    %v342 = vmul.f32 %v212, %v311
    %v343 = vmul.f32 %v214, %v315
    %v344 = vmul.f32 %v216, %v319
    %v345 = vmul.f32 %v218, %v323
    %v346 = vmul.f32 %v220, %v327
    %v347 = vmul.f32 %v222, %v331
    %v348 = vpack.c.bf16 %v340, %v340
    %v349 = vpack.c.bf16 %v341, %v341
    %v350 = vpack.c.bf16 %v342, %v342
    %v351 = vpack.c.bf16 %v343, %v343
    %v352 = vpack.c.bf16 %v344, %v344
    %v353 = vpack.c.bf16 %v345, %v345
    %v354 = vpack.c.bf16 %v346, %v346
    %v355 = vpack.c.bf16 %v347, %v347
    %357 = vset.pattern.permute.xlu0 0
    %358 = vperm.xlu0 %357, %v348
    %v359 = vpop.permute.xlu0 %358
    %362 = vset.pattern.permute.xlu0 0
    %363 = vperm.xlu0 %362, %v349
    %v364 = vpop.permute.xlu0 %363
    %367 = vset.pattern.permute.xlu0 0
    %368 = vperm.xlu0 %367, %v350
    %v369 = vpop.permute.xlu0 %368
    %372 = vset.pattern.permute.xlu0 0
    %373 = vperm.xlu0 %372, %v351
    %v374 = vpop.permute.xlu0 %373
    %377 = vset.pattern.permute.xlu0 0
    %378 = vperm.xlu0 %377, %v352
    %v379 = vpop.permute.xlu0 %378
    %382 = vset.pattern.permute.xlu0 0
    %383 = vperm.xlu0 %382, %v353
    %v384 = vpop.permute.xlu0 %383
    %387 = vset.pattern.permute.xlu0 0
    %388 = vperm.xlu0 %387, %v354
    %v389 = vpop.permute.xlu0 %388
    %392 = vset.pattern.permute.xlu0 0
    %393 = vperm.xlu0 %392, %v355
    %v394 = vpop.permute.xlu0 %393
    %v396 = vmul.bf16 %v359, %v40
    %v397 = vmul.bf16 %v364, %v41
    %v398 = vmul.bf16 %v369, %v42
    %v399 = vmul.bf16 %v374, %v43
    %v400 = vmul.bf16 %v379, %v44
    %v401 = vmul.bf16 %v384, %v45
    %v402 = vmul.bf16 %v389, %v46
    %v403 = vmul.bf16 %v394, %v47
    %v404 = vunpack.c.l.bf16 %v396
    %v405 = vunpack.c.l.bf16 %v397
    %v406 = vunpack.c.l.bf16 %v398
    %v407 = vunpack.c.l.bf16 %v399
    %v408 = vunpack.c.l.bf16 %v400
    %v409 = vunpack.c.l.bf16 %v401
    %v410 = vunpack.c.l.bf16 %v402
    %v411 = vunpack.c.l.bf16 %v403
    %v412 = vsel %vm72, %v404, 0.0
    %v413 = vrot.slane %v412, 4
    %v414 = vadd.f32 %v412, %v413
    %v415 = vrot.slane %v414, 2
    %v416 = vadd.f32 %v414, %v415
    %v417 = vrot.slane %v416, 1
    %v418 = vadd.f32 %v416, %v417
    %v419 = vsel %vm72, %v405, 0.0
    %v420 = vrot.slane %v419, 4
    %v421 = vadd.f32 %v419, %v420
    %v422 = vrot.slane %v421, 2
    %v423 = vadd.f32 %v421, %v422
    %v424 = vrot.slane %v423, 1
    %v425 = vadd.f32 %v423, %v424
    %v426 = vsel %vm72, %v406, 0.0
    %v427 = vrot.slane %v426, 4
    %v428 = vadd.f32 %v426, %v427
    %v429 = vrot.slane %v428, 2
    %v430 = vadd.f32 %v428, %v429
    %v431 = vrot.slane %v430, 1
    %v432 = vadd.f32 %v430, %v431
    %v433 = vsel %vm72, %v407, 0.0
    %v434 = vrot.slane %v433, 4
    %v435 = vadd.f32 %v433, %v434
    %v436 = vrot.slane %v435, 2
    %v437 = vadd.f32 %v435, %v436
    %v438 = vrot.slane %v437, 1
    %v439 = vadd.f32 %v437, %v438
    %v440 = vsel %vm72, %v408, 0.0
    %v441 = vrot.slane %v440, 4
    %v442 = vadd.f32 %v440, %v441
    %v443 = vrot.slane %v442, 2
    %v444 = vadd.f32 %v442, %v443
    %v445 = vrot.slane %v444, 1
    %v446 = vadd.f32 %v444, %v445
    %v447 = vsel %vm72, %v409, 0.0
    %v448 = vrot.slane %v447, 4
    %v449 = vadd.f32 %v447, %v448
    %v450 = vrot.slane %v449, 2
    %v451 = vadd.f32 %v449, %v450
    %v452 = vrot.slane %v451, 1
    %v453 = vadd.f32 %v451, %v452
    %v454 = vsel %vm72, %v410, 0.0
    %v455 = vrot.slane %v454, 4
    %v456 = vadd.f32 %v454, %v455
    %v457 = vrot.slane %v456, 2
    %v458 = vadd.f32 %v456, %v457
    %v459 = vrot.slane %v458, 1
    %v460 = vadd.f32 %v458, %v459
    %v461 = vsel %vm72, %v411, 0.0
    %v462 = vrot.slane %v461, 4
    %v463 = vadd.f32 %v461, %v462
    %v464 = vrot.slane %v463, 2
    %v465 = vadd.f32 %v463, %v464
    %v466 = vrot.slane %v465, 1
    %v467 = vadd.f32 %v465, %v466
    %v468 = vadd.f32 %v418, 0.0
    %v469 = vadd.f32 %v425, 0.0
    %v470 = vadd.f32 %v432, 0.0
    %v471 = vadd.f32 %v439, 0.0
    %v472 = vadd.f32 %v446, 0.0
    %v473 = vadd.f32 %v453, 0.0
    %v474 = vadd.f32 %v460, 0.0
    %v475 = vadd.f32 %v467, 0.0
    %s476 = scalar_lea.vmem [#allocation5], 32
    %v477 = vld [vmem:[%s476] sm:$0xf]
    %v478 = vld [vmem:[%s476 + $0x4] sm:$0xf]
    %v479 = vld [vmem:[%s476 + $0x8] sm:$0xf]
    %v480 = vld [vmem:[%s476 + $0xc] sm:$0xf]
    %v481 = vld [vmem:[%s476 + $0x10] sm:$0xf]
    %v482 = vld [vmem:[%s476 + $0x14] sm:$0xf]
    %v483 = vld [vmem:[%s476 + $0x18] sm:$0xf]
    %v484 = vld [vmem:[%s476 + $0x1c] sm:$0xf]
    %s485 = scalar_lea.vmem [#allocation2], 32
    %v486 = vld [vmem:[%s485] sm:$0xf]
    %v487 = vld [vmem:[%s485 + $0x4] sm:$0xf]
    %v488 = vld [vmem:[%s485 + $0x8] sm:$0xf]
    %v489 = vld [vmem:[%s485 + $0xc] sm:$0xf]
    %v490 = vld [vmem:[%s485 + $0x10] sm:$0xf]
    %v491 = vld [vmem:[%s485 + $0x14] sm:$0xf]
    %v492 = vld [vmem:[%s485 + $0x18] sm:$0xf]
    %v493 = vld [vmem:[%s485 + $0x1c] sm:$0xf]
    %v494 = vmul.bf16 %v477, %v486
    %v495 = vmul.bf16 %v478, %v487
    %v496 = vmul.bf16 %v479, %v488
    %v497 = vmul.bf16 %v480, %v489
    %v498 = vmul.bf16 %v481, %v490
    %v499 = vmul.bf16 %v482, %v491
    %v500 = vmul.bf16 %v483, %v492
    %v501 = vmul.bf16 %v484, %v493
    %v502 = vunpack.c.l.bf16 %v494
    %v503 = vunpack.c.l.bf16 %v495
    %v504 = vunpack.c.l.bf16 %v496
    %v505 = vunpack.c.l.bf16 %v497
    %v506 = vunpack.c.l.bf16 %v498
    %v507 = vunpack.c.l.bf16 %v499
    %v508 = vunpack.c.l.bf16 %v500
    %v509 = vunpack.c.l.bf16 %v501
    %v510 = vsel %vm72, %v502, 0.0
    %511 = vadd.xlane.f32.xlu0 %v510
    %v512 = vpop.xlane.xlu0 %511
    %v513 = vsel %vm72, %v503, 0.0
    %514 = vadd.xlane.f32.xlu0 %v513
    %v515 = vpop.xlane.xlu0 %514
    %v516 = vsel %vm72, %v504, 0.0
    %517 = vadd.xlane.f32.xlu0 %v516
    %v518 = vpop.xlane.xlu0 %517
    %v519 = vsel %vm72, %v505, 0.0
    %520 = vadd.xlane.f32.xlu0 %v519
    %v521 = vpop.xlane.xlu0 %520
    %v522 = vsel %vm72, %v506, 0.0
    %523 = vadd.xlane.f32.xlu0 %v522
    %v524 = vpop.xlane.xlu0 %523
    %v525 = vsel %vm72, %v507, 0.0
    %526 = vadd.xlane.f32.xlu0 %v525
    %v527 = vpop.xlane.xlu0 %526
    %v528 = vsel %vm72, %v508, 0.0
    %529 = vadd.xlane.f32.xlu0 %v528
    %v530 = vpop.xlane.xlu0 %529
    %v531 = vsel %vm72, %v509, 0.0
    %532 = vadd.xlane.f32.xlu0 %v531
    %v533 = vpop.xlane.xlu0 %532
    %v542 = vlaneseq
    %v543 = vshrl.u32 %v542, 7
    %v544 = vsub.s32 %v106, %v543
    %v545 = vrot.slane %v512, %v544
    %v546 = vlaneseq
    %v547 = vshrl.u32 %v546, 7
    %v548 = vsub.s32 %v106, %v547
    %v549 = vrot.slane %v515, %v548
    %v550 = vlaneseq
    %v551 = vshrl.u32 %v550, 7
    %v552 = vsub.s32 %v106, %v551
    %v553 = vrot.slane %v518, %v552
    %v554 = vlaneseq
    %v555 = vshrl.u32 %v554, 7
    %v556 = vsub.s32 %v106, %v555
    %v557 = vrot.slane %v521, %v556
    %v558 = vlaneseq
    %v559 = vshrl.u32 %v558, 7
    %v560 = vsub.s32 %v106, %v559
    %v561 = vrot.slane %v524, %v560
    %v562 = vlaneseq
    %v563 = vshrl.u32 %v562, 7
    %v564 = vsub.s32 %v106, %v563
    %v565 = vrot.slane %v527, %v564
    %v566 = vlaneseq
    %v567 = vshrl.u32 %v566, 7
    %v568 = vsub.s32 %v106, %v567
    %v569 = vrot.slane %v530, %v568
    %v570 = vlaneseq
    %v571 = vshrl.u32 %v570, 7
    %v572 = vsub.s32 %v106, %v571
    %v573 = vrot.slane %v533, %v572
    %v574 = vsel %vm139, %v549, %v545
    %v575 = vsel %vm141, %v553, %v574
    %v576 = vsel %vm143, %v557, %v575
    %v577 = vsel %vm145, %v561, %v576
    %v578 = vsel %vm147, %v565, %v577
    %v579 = vsel %vm149, %v569, %v578
    %v580 = vsel %vm151, %v573, %v579
    %v582 = vsel %vm154, %v580, -inf
    %583 = vmax.xlane.f32.xlu0 %v582
    %v584 = vpop.xlane.xlu0 %583
    %v586 = vlaneseq
    %v587 = vshrl.u32 %v586, 7
    %v588 = vsub.s32 0, %v587
    %v589 = vrot.slane %v584, %v588
    %v590 = vlaneseq
    %v591 = vshrl.u32 %v590, 7
    %v592 = vsub.s32 1, %v591
    %v593 = vrot.slane %v584, %v592
    %v594 = vlaneseq
    %v595 = vshrl.u32 %v594, 7
    %v596 = vsub.s32 2, %v595
    %v597 = vrot.slane %v584, %v596
    %v598 = vlaneseq
    %v599 = vshrl.u32 %v598, 7
    %v600 = vsub.s32 3, %v599
    %v601 = vrot.slane %v584, %v600
    %v602 = vlaneseq
    %v603 = vshrl.u32 %v602, 7
    %v604 = vsub.s32 4, %v603
    %v605 = vrot.slane %v584, %v604
    %v606 = vlaneseq
    %v607 = vshrl.u32 %v606, 7
    %v608 = vsub.s32 5, %v607
    %v609 = vrot.slane %v584, %v608
    %v610 = vlaneseq
    %v611 = vshrl.u32 %v610, 7
    %v612 = vsub.s32 6, %v611
    %v613 = vrot.slane %v584, %v612
    %v614 = vlaneseq
    %v615 = vshrl.u32 %v614, 7
    %v616 = vsub.s32 7, %v615
    %v617 = vrot.slane %v584, %v616
    %v626 = vsub.f32 %v512, %v589
    %v627 = vsub.f32 %v515, %v593
    %v628 = vsub.f32 %v518, %v597
    %v629 = vsub.f32 %v521, %v601
    %v630 = vsub.f32 %v524, %v605
    %v631 = vsub.f32 %v527, %v609
    %v632 = vsub.f32 %v530, %v613
    %v633 = vsub.f32 %v533, %v617
    %v634 = vmul.f32 %v626, 1.442695
    %v635 = vpow.pop %v634
    %v636 = vmul.f32 %v627, 1.442695
    %v637 = vpow.pop %v636
    %v638 = vmul.f32 %v628, 1.442695
    %v639 = vpow.pop %v638
    %v640 = vmul.f32 %v629, 1.442695
    %v641 = vpow.pop %v640
    %v642 = vmul.f32 %v630, 1.442695
    %v643 = vpow.pop %v642
    %v644 = vmul.f32 %v631, 1.442695
    %v645 = vpow.pop %v644
    %v646 = vmul.f32 %v632, 1.442695
    %v647 = vpow.pop %v646
    %v648 = vmul.f32 %v633, 1.442695
    %v649 = vpow.pop %v648
    %658 = vset.pattern.permute.xlu0 0
    %659 = vperm.xlu0 %658, %v635
    %v660 = vpop.permute.xlu0 %659
    %661 = vset.pattern.permute.xlu0 0
    %662 = vperm.xlu0 %661, %v637
    %v663 = vpop.permute.xlu0 %662
    %664 = vset.pattern.permute.xlu0 0
    %665 = vperm.xlu0 %664, %v639
    %v666 = vpop.permute.xlu0 %665
    %667 = vset.pattern.permute.xlu0 0
    %668 = vperm.xlu0 %667, %v641
    %v669 = vpop.permute.xlu0 %668
    %670 = vset.pattern.permute.xlu0 0
    %671 = vperm.xlu0 %670, %v643
    %v672 = vpop.permute.xlu0 %671
    %673 = vset.pattern.permute.xlu0 0
    %674 = vperm.xlu0 %673, %v645
    %v675 = vpop.permute.xlu0 %674
    %676 = vset.pattern.permute.xlu0 0
    %677 = vperm.xlu0 %676, %v647
    %v678 = vpop.permute.xlu0 %677
    %679 = vset.pattern.permute.xlu0 0
    %680 = vperm.xlu0 %679, %v649
    %v681 = vpop.permute.xlu0 %680
    %v682 = vlaneseq
    %v683 = vshrl.u32 %v682, 7
    %v684 = vsub.s32 %v106, %v683
    %v685 = vrot.slane %v660, %v684
    %v686 = vlaneseq
    %v687 = vshrl.u32 %v686, 7
    %v688 = vsub.s32 %v106, %v687
    %v689 = vrot.slane %v663, %v688
    %v690 = vlaneseq
    %v691 = vshrl.u32 %v690, 7
    %v692 = vsub.s32 %v106, %v691
    %v693 = vrot.slane %v666, %v692
    %v694 = vlaneseq
    %v695 = vshrl.u32 %v694, 7
    %v696 = vsub.s32 %v106, %v695
    %v697 = vrot.slane %v669, %v696
    %v698 = vlaneseq
    %v699 = vshrl.u32 %v698, 7
    %v700 = vsub.s32 %v106, %v699
    %v701 = vrot.slane %v672, %v700
    %v702 = vlaneseq
    %v703 = vshrl.u32 %v702, 7
    %v704 = vsub.s32 %v106, %v703
    %v705 = vrot.slane %v675, %v704
    %v706 = vlaneseq
    %v707 = vshrl.u32 %v706, 7
    %v708 = vsub.s32 %v106, %v707
    %v709 = vrot.slane %v678, %v708
    %v710 = vlaneseq
    %v711 = vshrl.u32 %v710, 7
    %v712 = vsub.s32 %v106, %v711
    %v713 = vrot.slane %v681, %v712
    %v714 = vsel %vm139, %v689, %v685
    %v715 = vsel %vm141, %v693, %v714
    %v716 = vsel %vm143, %v697, %v715
    %v717 = vsel %vm145, %v701, %v716
    %v718 = vsel %vm147, %v705, %v717
    %v719 = vsel %vm149, %v709, %v718
    %v720 = vsel %vm151, %v713, %v719
    %v722 = vsel %vm154, %v720, 0.0
    %723 = vadd.xlane.f32.xlu0 %v722
    %v724 = vpop.xlane.xlu0 %723
    %v725 = vrcp.pop %v724
    %v727 = vlaneseq
    %v728 = vshrl.u32 %v727, 7
    %v729 = vsub.s32 0, %v728
    %v730 = vrot.slane %v725, %v729
    %v731 = vlaneseq
    %v732 = vshrl.u32 %v731, 7
    %v733 = vsub.s32 1, %v732
    %v734 = vrot.slane %v725, %v733
    %v735 = vlaneseq
    %v736 = vshrl.u32 %v735, 7
    %v737 = vsub.s32 2, %v736
    %v738 = vrot.slane %v725, %v737
    %v739 = vlaneseq
    %v740 = vshrl.u32 %v739, 7
    %v741 = vsub.s32 3, %v740
    %v742 = vrot.slane %v725, %v741
    %v743 = vlaneseq
    %v744 = vshrl.u32 %v743, 7
    %v745 = vsub.s32 4, %v744
    %v746 = vrot.slane %v725, %v745
    %v747 = vlaneseq
    %v748 = vshrl.u32 %v747, 7
    %v749 = vsub.s32 5, %v748
    %v750 = vrot.slane %v725, %v749
    %v751 = vlaneseq
    %v752 = vshrl.u32 %v751, 7
    %v753 = vsub.s32 6, %v752
    %v754 = vrot.slane %v725, %v753
    %v755 = vlaneseq
    %v756 = vshrl.u32 %v755, 7
    %v757 = vsub.s32 7, %v756
    %v758 = vrot.slane %v725, %v757
    %v767 = vmul.f32 %v635, %v730
    %v768 = vmul.f32 %v637, %v734
    %v769 = vmul.f32 %v639, %v738
    %v770 = vmul.f32 %v641, %v742
    %v771 = vmul.f32 %v643, %v746
    %v772 = vmul.f32 %v645, %v750
    %v773 = vmul.f32 %v647, %v754
    %v774 = vmul.f32 %v649, %v758
    %v775 = vpack.c.bf16 %v767, %v767
    %v776 = vpack.c.bf16 %v768, %v768
    %v777 = vpack.c.bf16 %v769, %v769
    %v778 = vpack.c.bf16 %v770, %v770
    %v779 = vpack.c.bf16 %v771, %v771
    %v780 = vpack.c.bf16 %v772, %v772
    %v781 = vpack.c.bf16 %v773, %v773
    %v782 = vpack.c.bf16 %v774, %v774
    %784 = vset.pattern.permute.xlu0 0
    %785 = vperm.xlu0 %784, %v775
    %v786 = vpop.permute.xlu0 %785
    %789 = vset.pattern.permute.xlu0 0
    %790 = vperm.xlu0 %789, %v776
    %v791 = vpop.permute.xlu0 %790
    %794 = vset.pattern.permute.xlu0 0
    %795 = vperm.xlu0 %794, %v777
    %v796 = vpop.permute.xlu0 %795
    %799 = vset.pattern.permute.xlu0 0
    %800 = vperm.xlu0 %799, %v778
    %v801 = vpop.permute.xlu0 %800
    %804 = vset.pattern.permute.xlu0 0
    %805 = vperm.xlu0 %804, %v779
    %v806 = vpop.permute.xlu0 %805
    %809 = vset.pattern.permute.xlu0 0
    %810 = vperm.xlu0 %809, %v780
    %v811 = vpop.permute.xlu0 %810
    %814 = vset.pattern.permute.xlu0 0
    %815 = vperm.xlu0 %814, %v781
    %v816 = vpop.permute.xlu0 %815
    %819 = vset.pattern.permute.xlu0 0
    %820 = vperm.xlu0 %819, %v782
    %v821 = vpop.permute.xlu0 %820
    %v823 = vmul.bf16 %v786, %v477
    %v824 = vmul.bf16 %v791, %v478
    %v825 = vmul.bf16 %v796, %v479
    %v826 = vmul.bf16 %v801, %v480
    %v827 = vmul.bf16 %v806, %v481
    %v828 = vmul.bf16 %v811, %v482
    %v829 = vmul.bf16 %v816, %v483
    %v830 = vmul.bf16 %v821, %v484
    %v831 = vunpack.c.l.bf16 %v823
    %v832 = vunpack.c.l.bf16 %v824
    %v833 = vunpack.c.l.bf16 %v825
    %v834 = vunpack.c.l.bf16 %v826
    %v835 = vunpack.c.l.bf16 %v827
    %v836 = vunpack.c.l.bf16 %v828
    %v837 = vunpack.c.l.bf16 %v829
    %v838 = vunpack.c.l.bf16 %v830
    %v839 = vsel %vm72, %v831, 0.0
    %v840 = vrot.slane %v839, 4
    %v841 = vadd.f32 %v839, %v840
    %v842 = vrot.slane %v841, 2
    %v843 = vadd.f32 %v841, %v842
    %v844 = vrot.slane %v843, 1
    %v845 = vadd.f32 %v843, %v844
    %v846 = vsel %vm72, %v832, 0.0
    %v847 = vrot.slane %v846, 4
    %v848 = vadd.f32 %v846, %v847
    %v849 = vrot.slane %v848, 2
    %v850 = vadd.f32 %v848, %v849
    %v851 = vrot.slane %v850, 1
    %v852 = vadd.f32 %v850, %v851
    %v853 = vsel %vm72, %v833, 0.0
    %v854 = vrot.slane %v853, 4
    %v855 = vadd.f32 %v853, %v854
    %v856 = vrot.slane %v855, 2
    %v857 = vadd.f32 %v855, %v856
    %v858 = vrot.slane %v857, 1
    %v859 = vadd.f32 %v857, %v858
    %v860 = vsel %vm72, %v834, 0.0
    %v861 = vrot.slane %v860, 4
    %v862 = vadd.f32 %v860, %v861
    %v863 = vrot.slane %v862, 2
    %v864 = vadd.f32 %v862, %v863
    %v865 = vrot.slane %v864, 1
    %v866 = vadd.f32 %v864, %v865
    %v867 = vsel %vm72, %v835, 0.0
    %v868 = vrot.slane %v867, 4
    %v869 = vadd.f32 %v867, %v868
    %v870 = vrot.slane %v869, 2
    %v871 = vadd.f32 %v869, %v870
    %v872 = vrot.slane %v871, 1
    %v873 = vadd.f32 %v871, %v872
    %v874 = vsel %vm72, %v836, 0.0
    %v875 = vrot.slane %v874, 4
    %v876 = vadd.f32 %v874, %v875
    %v877 = vrot.slane %v876, 2
    %v878 = vadd.f32 %v876, %v877
    %v879 = vrot.slane %v878, 1
    %v880 = vadd.f32 %v878, %v879
    %v881 = vsel %vm72, %v837, 0.0
    %v882 = vrot.slane %v881, 4
    %v883 = vadd.f32 %v881, %v882
    %v884 = vrot.slane %v883, 2
    %v885 = vadd.f32 %v883, %v884
    %v886 = vrot.slane %v885, 1
    %v887 = vadd.f32 %v885, %v886
    %v888 = vsel %vm72, %v838, 0.0
    %v889 = vrot.slane %v888, 4
    %v890 = vadd.f32 %v888, %v889
    %v891 = vrot.slane %v890, 2
    %v892 = vadd.f32 %v890, %v891
    %v893 = vrot.slane %v892, 1
    %v894 = vadd.f32 %v892, %v893
    %v895 = vadd.f32 %v468, %v845
    %v896 = vadd.f32 %v469, %v852
    %v897 = vadd.f32 %v470, %v859
    %v898 = vadd.f32 %v471, %v866
    %v899 = vadd.f32 %v472, %v873
    %v900 = vadd.f32 %v473, %v880
    %v901 = vadd.f32 %v474, %v887
    %v902 = vadd.f32 %v475, %v894
    %v911 = vsel %vm139, %v896, %v895
    %v912 = vsel %vm141, %v897, %v911
    %v913 = vsel %vm143, %v898, %v912
    %v914 = vsel %vm145, %v899, %v913
    %v915 = vsel %vm147, %v900, %v914
    %v916 = vsel %vm149, %v901, %v915
    %v917 = vsel %vm151, %v902, %v916
    %919 = vst.msk [vmem:[#allocation7] sm:$0xff] %vm72, %v917
    // Predicated region
    $region18: #{tpu_custom_call.1} parent=1 // pred_check
      _
    $region19: #{tpu_custom_call.1} parent=1 // pred_check_branch
      %921 = sbr.rel (0) target = $region21
    $region20: #{tpu_custom_call.1} parent=1 // pred_region
      %s923 = ssub.s32 128, 128
      %924 = vsyncadd [#allocation4], %s923
      %s926 = sshll.u32 [#allocation7], 4
      %s927 = int_to_ptr.vmem [resolvable:$true] %s926
      %929 = dma.vmem_to_hbm [thread:$0]  %s927, 128, %s2, [#allocation4]
    $region21: #{tpu_custom_call.1} parent=1 // pred_fallthru
      _
    // Predicated region
    $region22: #{tpu_custom_call.1} parent=1 // pred_check
      _
    $region23: #{tpu_custom_call.1} parent=1 // pred_check_branch
      %931 = sbr.rel (0) target = $region25
    $region24: #{tpu_custom_call.1} parent=1 // pred_region
      %932 = dma.done [#allocation4], 128
    $region25: #{tpu_custom_call.1} parent=1 // pred_fallthru
      _
    %933 = vsyncpa [#allocation3], 1
    %934 = vsyncpa [#allocation6], 1
    %935 = vsyncpa [#allocation4], 1

</llo_original>
